<compile_context>
chip_gen: v6e
topology: v6e:2x2x1
jax: 0.10.0
libtpu: 0.0.40
codegen_flags: <defaults>
</compile_context>

<pallas_src>
import jax
import jax.numpy as jnp
from jax.experimental import pallas as pl
from jax.experimental.pallas import tpu as pltpu


def _mlp_kernel(x_ref, w1T_ref, b1_ref, w2c_ref, b2_ref, o_ref):
    # x tile arrives in its native (TILE_B, D) layout; transpose on-chip so both
    # matmul results stay lane-dense (batch on lanes):
    #   fc1: (H, D) @ (D, TILE_B) -> (H, TILE_B), f32 MXU accumulation.
    h = jnp.dot(w1T_ref[...], x_ref[...].T, preferred_element_type=jnp.float32)
    h = jnp.maximum(h + b1_ref[...], 0.0)        # (H, 1) bias broadcasts over lanes
    # fc2 is an M=1, K=64 matmul -> keep it off the MXU: VPU multiply with the
    # (H, 1) w2 column + sublane reduce to a lane-dense (1, TILE_B) result.
    y = jnp.sum(h * w2c_ref[...], axis=0, keepdims=True)
    o_ref[...] = (y + b2_ref[0]).astype(o_ref.dtype)


def _auto_tile_b(D, dtype):
    """Batch-tile size from feature width, dtype and a VMEM budget."""
    itemsize = jnp.dtype(dtype).itemsize
    hbm_row = D * itemsize                        # real bytes of one x row in HBM
    vmem_row = 128 * pl.cdiv(D, 128) * itemsize   # lane-padded bytes of one row in VMEM
    # ~1 MiB of real x data per streamed block (>=512 KiB-class blocks needed to
    # reach 85%+ of HBM roofline), capped so the double-buffered x stream stays
    # under ~8 MiB of VMEM on every generation (incl. v7x's 64 MiB per TC).
    tile_b = max(128, (1 << 20) // hbm_row)
    tile_b = min(tile_b, max(128, (8 << 20) // (2 * vmem_row)))
    return 128 * max(1, tile_b // 128)


def regression_model_forward(x, w1, b1, w2, b2, *, tile_b=None):
    """x: (B, D); w1: (D, H); b1: (H,); w2: (H, 1); b2: (1,). Returns (B, 1) f32.

    x is streamed in whatever dtype it arrives in; feeding bf16 x (and hence
    bf16 w1) halves HBM bytes of the dominant stream on v5e/v6e/v7x while
    keeping f32 accumulation. The wrapper never copies/pads/transposes x.
    """
    B, D = x.shape
    H = w1.shape[1]

    if tile_b is None:
        tile_b = _auto_tile_b(D, x.dtype)
    # v7x megacore: with enough batch, keep >= 2 grid steps so both TensorCores
    # get work ("parallel" batch axis).
    if B > 256:
        tile_b = min(tile_b, 128 * pl.cdiv(B, 2 * 128))
    if tile_b >= B:
        # Single block covering the whole array: always layout-legal.
        tile_b = B
    else:
        # Streamed blocks must be lane-aligned (output block last dim = tile_b).
        tile_b = 128 * max(1, tile_b // 128)
    num_tiles = pl.cdiv(B, tile_b)

    # Tiny weight/bias tensors: VMEM-resident across the whole grid.
    w1T = jnp.asarray(w1).T.astype(x.dtype)            # (H, D)
    b1c = jnp.asarray(b1).reshape(H, 1).astype(jnp.float32)   # (H, 1), lane-broadcast
    w2c = jnp.asarray(w2).reshape(H, 1).astype(jnp.float32)   # (H, 1), used on VPU
    b2s = jnp.asarray(b2).reshape(1).astype(jnp.float32)      # true scalar -> SMEM

    yT = pl.pallas_call(
        _mlp_kernel,
        out_shape=jax.ShapeDtypeStruct((1, B), jnp.float32),
        grid=(num_tiles,),
        in_specs=[
            # Streamed x tile in native (B, D) layout; partial last block is
            # masked by Pallas (no wrapper-side pad).  Add
            # pipeline_mode=pl.Buffered(3) only if a trace shows exposed DMA.
            pl.BlockSpec((tile_b, D), lambda i: (i, 0)),
            pl.BlockSpec((H, D), lambda i: (0, 0)),           # resident w1.T
            pl.BlockSpec((H, 1), lambda i: (0, 0)),           # resident b1
            pl.BlockSpec((H, 1), lambda i: (0, 0)),           # resident w2 column
            pl.BlockSpec(memory_space=pltpu.MemorySpace.SMEM),  # scalar b2
        ],
        out_specs=pl.BlockSpec((1, tile_b), lambda i: (0, i)),  # lane-dense store
        compiler_params=pltpu.CompilerParams(
            dimension_semantics=("parallel",),   # megacore-shard batch on v7x
            vmem_limit_bytes=32 * 1024 * 1024,   # safe on v5e/v6e and v7x (64 MiB/TC)
        ),
    )(x, w1T, b1c, w2c, b2s)

    # (1, B) -> (B, 1) is a pure metadata reshape (same row-major data order).
    return yT.reshape(B, 1)


def init_params(key, input_size, hidden=64):
    # Deterministic init mirroring nn.Linear's uniform(-1/sqrt(fan_in), 1/sqrt(fan_in)).
    k1, k2, k3, k4 = jax.random.split(key, 4)
    bound1 = 1.0 / jnp.sqrt(input_size)
    bound2 = 1.0 / jnp.sqrt(hidden)
    w1 = jax.random.uniform(k1, (input_size, hidden), jnp.float32, -bound1, bound1)
    b1 = jax.random.uniform(k2, (hidden,), jnp.float32, -bound1, bound1)
    w2 = jax.random.uniform(k3, (hidden, 1), jnp.float32, -bound2, bound2)
    b2 = jax.random.uniform(k4, (1,), jnp.float32, -bound2, bound2)
    return w1, b1, w2, b2


def _reference(x, w1, b1, w2, b2):
    return jnp.maximum(x @ w1 + b1, 0.0) @ w2 + b2


if __name__ == "__main__":
    key = jax.random.PRNGKey(0)
    kx, kp = jax.random.split(key)

    batch, input_size = 8, 32
    x = jax.random.normal(kx, (batch, input_size), jnp.float32)
    w1, b1, w2, b2 = init_params(kp, input_size)

    # 1) Small f32 case (single full-array block), check against pure-JAX reference.
    out = jax.block_until_ready(regression_model_forward(x, w1, b1, w2, b2))
    ref = _reference(x, w1, b1, w2, b2)
    assert out.shape == (batch, 1)
    assert jnp.allclose(out, ref, atol=1e-4, rtol=1e-4)

    # 2) Multi-tile + ragged tail: B=300 > 256 forces >=2 grid steps (megacore
    #    path) and a masked partial last block — no wrapper-side pad of x.
    batch2 = 300
    x2 = jax.random.normal(kx, (batch2, input_size), jnp.float32)
    out2 = jax.block_until_ready(regression_model_forward(x2, w1, b1, w2, b2))
    ref2 = _reference(x2, w1, b1, w2, b2)
    assert out2.shape == (batch2, 1)
    assert jnp.allclose(out2, ref2, atol=1e-4, rtol=1e-4)

    # 3) bf16 x stream (producer-supplied bf16 — no wrapper copy of x); compare
    #    against a reference computed with identically quantized inputs.
    x2_bf16 = x2.astype(jnp.bfloat16)
    out3 = jax.block_until_ready(regression_model_forward(x2_bf16, w1, b1, w2, b2))
    xq = x2_bf16.astype(jnp.float32)
    w1q = w1.astype(jnp.bfloat16).astype(jnp.float32)
    ref3 = _reference(xq, w1q, b1, w2, b2)
    assert out3.shape == (batch2, 1)
    assert jnp.allclose(out3, ref3, atol=1e-2, rtol=1e-2)

    print("KERNEL_OK")
</pallas_src>

<mosaic_0001>
module attributes {stable_mosaic.version = 11 : i64} {
  func.func @_mlp_kernel(%arg0: i32, %arg1: memref<8x32xf32, #tpu.memory_space<vmem>>, %arg2: memref<64x32xf32, #tpu.memory_space<vmem>>, %arg3: memref<64x1xf32, #tpu.memory_space<vmem>>, %arg4: memref<64x1xf32, #tpu.memory_space<vmem>>, %arg5: memref<1xf32, #tpu.memory_space<smem>>, %arg6: memref<1x8xf32, #tpu.memory_space<vmem>>) attributes {dimension_semantics = [#tpu.dimension_semantics<parallel>], iteration_bounds = array<i64: 1>, scalar_prefetch = 0 : i64, scratch_operands = 0 : i64, tpu.core_type = #tpu.core_type<tc>, window_params = [{transform_indices = @transform_0, window_bounds = array<i64: 8, 32>}, {pipeline_mode = #tpu.pipeline_mode<synchronous>, transform_indices = @transform_1, window_bounds = array<i64: 64, 32>}, {pipeline_mode = #tpu.pipeline_mode<synchronous>, transform_indices = @transform_2, window_bounds = array<i64: 64, 1>}, {pipeline_mode = #tpu.pipeline_mode<synchronous>, transform_indices = @transform_3, window_bounds = array<i64: 64, 1>}, {transform_indices = @transform_4, window_bounds = array<i64: 1>}, {transform_indices = @transform_5, window_bounds = array<i64: 1, 8>}]} {
    %c0 = arith.constant 0 : index
    %c0_0 = arith.constant 0 : index
    %0 = vector.load %arg2[%c0, %c0_0] : memref<64x32xf32, #tpu.memory_space<vmem>>, vector<64x32xf32>
    %c0_1 = arith.constant 0 : index
    %c0_2 = arith.constant 0 : index
    %1 = vector.load %arg1[%c0_1, %c0_2] : memref<8x32xf32, #tpu.memory_space<vmem>>, vector<8x32xf32>
    %2 = tpu.transpose %1, [1, 0] : vector<8x32xf32> -> vector<32x8xf32>
    %cst = arith.constant dense<0.000000e+00> : vector<64x8xf32>
    %3 = tpu.matmul %0, %2, %cst {dimension_numbers = #tpu.dot_dimension_numbers<[1], [0], [0], [1], [0, 0, 1, 1], [], []>} : vector<64x32xf32>, vector<32x8xf32>, vector<64x8xf32> -> vector<64x8xf32>
    %c0_3 = arith.constant 0 : index
    %c0_4 = arith.constant 0 : index
    %4 = vector.load %arg3[%c0_3, %c0_4] : memref<64x1xf32, #tpu.memory_space<vmem>>, vector<64x1xf32>
    %5 = vector.broadcast %4 : vector<64x1xf32> to vector<64x8xf32>
    %6 = arith.addf %3, %5 : vector<64x8xf32>
    %cst_5 = arith.constant 0.000000e+00 : f32
    %7 = vector.broadcast %cst_5 : f32 to vector<64x8xf32>
    %8 = arith.maximumf %6, %7 : vector<64x8xf32>
    %c0_6 = arith.constant 0 : index
    %c0_7 = arith.constant 0 : index
    %9 = vector.load %arg4[%c0_6, %c0_7] : memref<64x1xf32, #tpu.memory_space<vmem>>, vector<64x1xf32>
    %10 = vector.broadcast %9 : vector<64x1xf32> to vector<64x8xf32>
    %11 = arith.mulf %8, %10 : vector<64x8xf32>
    %cst_8 = arith.constant dense<0.000000e+00> : vector<8xf32>
    %12 = vector.multi_reduction <add>, %11, %cst_8 [0] : vector<64x8xf32> to vector<8xf32>
    %13 = vector.shape_cast %12 : vector<8xf32> to vector<1x8xf32>
    %c0_9 = arith.constant 0 : index
    %14 = memref.load %arg5[%c0_9] : memref<1xf32, #tpu.memory_space<smem>>
    %15 = vector.broadcast %14 : f32 to vector<1x8xf32>
    %16 = arith.addf %13, %15 : vector<1x8xf32>
    %c0_10 = arith.constant 0 : index
    %c0_11 = arith.constant 0 : index
    %17 = vector.load %arg6[%c0_10, %c0_11] : memref<1x8xf32, #tpu.memory_space<vmem>>, vector<1x8xf32>
    tpu.vector_store %arg6[%c0_10, %c0_11], %16 {strides = array<i32>} : memref<1x8xf32, #tpu.memory_space<vmem>>, vector<1x8xf32>,
    return
  }
  func.func @transform_0(%arg0: i32) -> (i32, i32) {
    %c0_i32 = arith.constant 0 : i32
    %c0_i32_0 = arith.constant 0 : i32
    return %arg0, %c0_i32 : i32, i32
  }
  func.func @transform_1(%arg0: i32) -> (i32, i32) {
    %c0_i32 = arith.constant 0 : i32
    %c0_i32_0 = arith.constant 0 : i32
    %c0_i32_1 = arith.constant 0 : i32
    return %c0_i32, %c0_i32_0 : i32, i32
  }
  func.func @transform_2(%arg0: i32) -> (i32, i32) {
    %c0_i32 = arith.constant 0 : i32
    %c0_i32_0 = arith.constant 0 : i32
    %c0_i32_1 = arith.constant 0 : i32
    return %c0_i32, %c0_i32_0 : i32, i32
  }
  func.func @transform_3(%arg0: i32) -> (i32, i32) {
    %c0_i32 = arith.constant 0 : i32
    %c0_i32_0 = arith.constant 0 : i32
    %c0_i32_1 = arith.constant 0 : i32
    return %c0_i32, %c0_i32_0 : i32, i32
  }
  func.func @transform_4(%arg0: i32) -> i32 {
    %c0_i32 = arith.constant 0 : i32
    %c0_i32_0 = arith.constant 0 : i32
    return %c0_i32 : i32
  }
  func.func @transform_5(%arg0: i32) -> (i32, i32) {
    %c0_i32 = arith.constant 0 : i32
    %c0_i32_0 = arith.constant 0 : i32
    return %c0_i32, %arg0 : i32, i32
  }
}

</mosaic_0001>

<llo_original>
// kernel: tpu_custom_call.1
$region0: #{tpu_custom_call.1}
  #allocation0 [shape = 'u32[]', space=smem, size = 0x4, offset = 0x4, fixed_abs, tag = 'smem constant byte address 0x4 - core index']
  #allocation1 [shape = 'u32[144,128]{1,0:T(1,128)}', space=vmem, size = 0x12000, scoped, tag = 'internal scratch']
  #allocation2 [shape = 'f32[1]{0:T(128)S(6)}', space=smem, size = 0x200, scoped, tag = 'scoped memory for tpu_custom_call.1']
  %s0 = inlined_call_operand.vmem [shape: f32[8,32], index: 0, kind: input, shape index: {}]
  %s1 = inlined_call_operand.vmem [shape: f32[64,32], index: 1, kind: input, shape index: {}]
  %s2 = inlined_call_operand.vmem [shape: f32[64,1], index: 2, kind: input, shape index: {}]
  %s3 = inlined_call_operand.vmem [shape: f32[64,1], index: 3, kind: input, shape index: {}]
  %s4 = inlined_call_operand.<no memory space> [shape: f32[1], index: 4, kind: input, shape index: {}]
  %s5 = inlined_call_operand.hbm [shape: f32[1,8], index: 5, kind: output, shape index: {}]
  %s6 = sld [smem:[#allocation0]]
  $region30: #{tpu_custom_call.1} parent=0
    _
  %s8 = ssub.s32 1, %s6
  %s9 = scalar_select 0, %s8, %s6
  %10 = sst [smem:[#allocation2]] %s4
  $region1: #{tpu_custom_call.1} parent=0
    #allocation3 [shape = 'u8[512]{0}', space=vmem, size = 0x400, scoped, tag = 'output window, operand 0, single buffered']
    #allocation4 [shape = 's32[1]{0}', space=sflag, size = 0x4, scoped, tag = 'scoped memory for tpu_custom_call.1']
    %11 = vsyncpa [#allocation4], 0
    // Predicated region
    $region2: #{tpu_custom_call.1} parent=1 // pred_check
      _
    $region3: #{tpu_custom_call.1} parent=1 // pred_check_branch
      %13 = sbr.rel (0) target = $region5
    $region4: #{tpu_custom_call.1} parent=1 // pred_region
      _
    $region5: #{tpu_custom_call.1} parent=1 // pred_fallthru
      _
    // Predicated region
    $region6: #{tpu_custom_call.1} parent=1 // pred_check
      _
    $region7: #{tpu_custom_call.1} parent=1 // pred_check_branch
      %15 = sbr.rel (0) target = $region9
    $region8: #{tpu_custom_call.1} parent=1 // pred_region
      _
    $region9: #{tpu_custom_call.1} parent=1 // pred_fallthru
      _
    // Predicated region
    $region10: #{tpu_custom_call.1} parent=1 // pred_check
      _
    $region11: #{tpu_custom_call.1} parent=1 // pred_check_branch
      %17 = sbr.rel (0) target = $region13
    $region12: #{tpu_custom_call.1} parent=1 // pred_region
      _
    $region13: #{tpu_custom_call.1} parent=1 // pred_fallthru
      _
    // Predicated region
    $region14: #{tpu_custom_call.1} parent=1 // pred_check
      _
    $region15: #{tpu_custom_call.1} parent=1 // pred_check_branch
      %19 = sbr.rel (0) target = $region17
    $region16: #{tpu_custom_call.1} parent=1 // pred_region
      _
    $region17: #{tpu_custom_call.1} parent=1 // pred_fallthru
      _
    // Predicated region
    $region18: #{tpu_custom_call.1} parent=1 // pred_check
      _
    $region19: #{tpu_custom_call.1} parent=1 // pred_check_branch
      %21 = sbr.rel (0) target = $region21
    $region20: #{tpu_custom_call.1} parent=1 // pred_region
      _
    $region21: #{tpu_custom_call.1} parent=1 // pred_fallthru
      _
    %v22 = vld [vmem:[%s1] sm:$0xff]
    %v23 = vld [vmem:[%s1 + $0x8] sm:$0xff]
    %v24 = vld [vmem:[%s1 + $0x10] sm:$0xff]
    %v25 = vld [vmem:[%s1 + $0x18] sm:$0xff]
    %v26 = vld [vmem:[%s1 + $0x20] sm:$0xff]
    %v27 = vld [vmem:[%s1 + $0x28] sm:$0xff]
    %v28 = vld [vmem:[%s1 + $0x30] sm:$0xff]
    %v29 = vld [vmem:[%s1 + $0x38] sm:$0xff]
    %v30 = vld [vmem:[%s0] sm:$0xff]
    %v31 = vld [vmem:[%s2] sm:$0xff]
    %v32 = vld [vmem:[%s2 + $0x8] sm:$0xff]
    %v33 = vld [vmem:[%s2 + $0x10] sm:$0xff]
    %v34 = vld [vmem:[%s2 + $0x18] sm:$0xff]
    %v35 = vld [vmem:[%s2 + $0x20] sm:$0xff]
    %v36 = vld [vmem:[%s2 + $0x28] sm:$0xff]
    %v37 = vld [vmem:[%s2 + $0x30] sm:$0xff]
    %v38 = vld [vmem:[%s2 + $0x38] sm:$0xff]
    %40 = vset.pattern.permute.xlu0 0
    %41 = vperm.xlu0 %40, %v31
    %v42 = vpop.permute.xlu0 %41
    %45 = vset.pattern.permute.xlu0 0
    %46 = vperm.xlu0 %45, %v32
    %v47 = vpop.permute.xlu0 %46
    %50 = vset.pattern.permute.xlu0 0
    %51 = vperm.xlu0 %50, %v33
    %v52 = vpop.permute.xlu0 %51
    %55 = vset.pattern.permute.xlu0 0
    %56 = vperm.xlu0 %55, %v34
    %v57 = vpop.permute.xlu0 %56
    %60 = vset.pattern.permute.xlu0 0
    %61 = vperm.xlu0 %60, %v35
    %v62 = vpop.permute.xlu0 %61
    %65 = vset.pattern.permute.xlu0 0
    %66 = vperm.xlu0 %65, %v36
    %v67 = vpop.permute.xlu0 %66
    %70 = vset.pattern.permute.xlu0 0
    %71 = vperm.xlu0 %70, %v37
    %v72 = vpop.permute.xlu0 %71
    %75 = vset.pattern.permute.xlu0 0
    %76 = vperm.xlu0 %75, %v38
    %v77 = vpop.permute.xlu0 %76
    %vm79 = vcmask 261120
    %v81 = vsel %vm79, %v22, 0
    %v84 = vsel %vm79, %v23, 0
    %v87 = vsel %vm79, %v24, 0
    %v90 = vsel %vm79, %v25, 0
    %v93 = vsel %vm79, %v26, 0
    %v96 = vsel %vm79, %v27, 0
    %v99 = vsel %vm79, %v28, 0
    %v102 = vsel %vm79, %v29, 0
    %v105 = vsel %vm79, %v30, 0
    %107 = vmatprep.subr.mxu0 0.0
    %108 = vmatpush1.xpose.msra.mxu0 0.0
    %109 = vmatprep.subr.mxu0 0.0
    %110 = vmatpush1.xpose.msra.mxu0 0.0
    %111 = vmatprep.subr.mxu0 0.0
    %112 = vmatpush1.xpose.msra.mxu0 0.0
    %113 = vmatprep.subr.mxu0 0.0
    %114 = vmatpush1.xpose.msra.mxu0 0.0
    %115 = vmatprep.subr.mxu0 0.0
    %116 = vmatpush1.xpose.msra.mxu0 0.0
    %117 = vmatprep.subr.mxu0 0.0
    %118 = vmatpush1.xpose.msra.mxu0 0.0
    %119 = vmatprep.subr.mxu0 0.0
    %120 = vmatpush1.xpose.msra.mxu0 0.0
    %121 = vmatprep.subr.mxu0 0.0
    %122 = vmatpush1.xpose.msra.mxu0 0.0
    %123 = vmatprep.subr.mxu0 0.0
    %124 = vmatpush1.xpose.msra.mxu0 0.0
    %125 = vmatprep.subr.mxu0 0.0
    %126 = vmatpush1.xpose.msra.mxu0 0.0
    %127 = vmatprep.subr.mxu0 0.0
    %128 = vmatpush1.xpose.msra.mxu0 0.0
    %129 = vmatprep.subr.mxu0 0.0
    %130 = vmatpush1.xpose.msra.mxu0 0.0
    %131 = vmatprep.subr.mxu0 0.0
    %132 = vmatpush1.xpose.msra.mxu0 0.0
    %133 = vmatprep.subr.mxu0 0.0
    %134 = vmatpush1.xpose.msra.mxu0 0.0
    %135 = vmatprep.subr.mxu0 0.0
    %136 = vmatpush1.xpose.msra.mxu0 0.0
    %137 = vmatprep.subr.mxu0 0.0
    %138 = vmatpush1.xpose.msra.mxu0 %v105
    %139 = vmatprep.subr.mxu0 0.0
    %140 = vmatpush2.xpose.msra.mxu0 0.0
    %141 = vmatprep.subr.mxu0 0.0
    %142 = vmatpush2.xpose.msra.mxu0 0.0
    %143 = vmatprep.subr.mxu0 0.0
    %144 = vmatpush2.xpose.msra.mxu0 0.0
    %145 = vmatprep.subr.mxu0 0.0
    %146 = vmatpush2.xpose.msra.mxu0 0.0
    %147 = vmatprep.subr.mxu0 0.0
    %148 = vmatpush2.xpose.msra.mxu0 0.0
    %149 = vmatprep.subr.mxu0 0.0
    %150 = vmatpush2.xpose.msra.mxu0 0.0
    %151 = vmatprep.subr.mxu0 0.0
    %152 = vmatpush2.xpose.msra.mxu0 0.0
    %153 = vmatprep.subr.mxu0 0.0
    %154 = vmatpush2.xpose.msra.mxu0 0.0
    %155 = vmatprep.subr.mxu0 0.0
    %156 = vmatpush2.xpose.msra.mxu0 0.0
    %157 = vmatprep.subr.mxu0 0.0
    %158 = vmatpush2.xpose.msra.mxu0 0.0
    %159 = vmatprep.subr.mxu0 0.0
    %160 = vmatpush2.xpose.msra.mxu0 0.0
    %161 = vmatprep.subr.mxu0 0.0
    %162 = vmatpush2.xpose.msra.mxu0 0.0
    %163 = vmatprep.subr.mxu0 0.0
    %164 = vmatpush2.xpose.msra.mxu0 0.0
    %165 = vmatprep.subr.mxu0 0.0
    %166 = vmatpush2.xpose.msra.mxu0 0.0
    %167 = vmatprep.subr.mxu0 0.0
    %168 = vmatpush2.xpose.msra.mxu0 0.0
    %169 = vmatprep.subr.mxu0 0.0
    %170 = vmatpush2.xpose.msra.mxu0 0.0
    %171 = vmatprep.mubr.f32.mxu0 0.0
    %172 = vmatmul.mubr.f32.gmra.mxu0 %v81
    %v173 = vpop.f32.mrf.mxu0
    %v174 = vadd.f32 %v42, %v173
    %v175 = vpop.f32.mrf.mxu0
    %176 = vmatprep.mubr.f32.mxu0 0.0
    %177 = vmatmul.mubr.f32.gmra.mxu0 %v84
    %v178 = vpop.f32.mrf.mxu0
    %v179 = vadd.f32 %v47, %v178
    %v180 = vpop.f32.mrf.mxu0
    %181 = vmatprep.mubr.f32.mxu0 0.0
    %182 = vmatmul.mubr.f32.gmra.mxu0 %v87
    %v183 = vpop.f32.mrf.mxu0
    %v184 = vadd.f32 %v52, %v183
    %v185 = vpop.f32.mrf.mxu0
    %186 = vmatprep.mubr.f32.mxu0 0.0
    %187 = vmatmul.mubr.f32.gmra.mxu0 %v90
    %v188 = vpop.f32.mrf.mxu0
    %v189 = vadd.f32 %v57, %v188
    %v190 = vpop.f32.mrf.mxu0
    %191 = vmatprep.mubr.f32.mxu0 0.0
    %192 = vmatmul.mubr.f32.gmra.mxu0 %v93
    %v193 = vpop.f32.mrf.mxu0
    %v194 = vadd.f32 %v62, %v193
    %v195 = vpop.f32.mrf.mxu0
    %196 = vmatprep.mubr.f32.mxu0 0.0
    %197 = vmatmul.mubr.f32.gmra.mxu0 %v96
    %v198 = vpop.f32.mrf.mxu0
    %v199 = vadd.f32 %v67, %v198
    %v200 = vpop.f32.mrf.mxu0
    %201 = vmatprep.mubr.f32.mxu0 0.0
    %202 = vmatmul.mubr.f32.gmra.mxu0 %v99
    %v203 = vpop.f32.mrf.mxu0
    %v204 = vadd.f32 %v72, %v203
    %v205 = vpop.f32.mrf.mxu0
    %206 = vmatprep.mubr.f32.mxu0 0.0
    %207 = vmatmul.mubr.f32.gmra.mxu0 %v102
    %v208 = vpop.f32.mrf.mxu0
    %v209 = vadd.f32 %v77, %v208
    %v210 = vpop.f32.mrf.mxu0
    %211 = vdwg.mxu0
    %v212 = vmax.f32 %v174, 0.0
    %v213 = vmax.f32 %v179, 0.0
    %v214 = vmax.f32 %v184, 0.0
    %v215 = vmax.f32 %v189, 0.0
    %v216 = vmax.f32 %v194, 0.0
    %v217 = vmax.f32 %v199, 0.0
    %v218 = vmax.f32 %v204, 0.0
    %v219 = vmax.f32 %v209, 0.0
    %v220 = vld [vmem:[%s3] sm:$0xff]
    %v221 = vld [vmem:[%s3 + $0x8] sm:$0xff]
    %v222 = vld [vmem:[%s3 + $0x10] sm:$0xff]
    %v223 = vld [vmem:[%s3 + $0x18] sm:$0xff]
    %v224 = vld [vmem:[%s3 + $0x20] sm:$0xff]
    %v225 = vld [vmem:[%s3 + $0x28] sm:$0xff]
    %v226 = vld [vmem:[%s3 + $0x30] sm:$0xff]
    %v227 = vld [vmem:[%s3 + $0x38] sm:$0xff]
    %229 = vset.pattern.permute.xlu0 0
    %230 = vperm.xlu0 %229, %v220
    %v231 = vpop.permute.xlu0 %230
    %234 = vset.pattern.permute.xlu0 0
    %235 = vperm.xlu0 %234, %v221
    %v236 = vpop.permute.xlu0 %235
    %239 = vset.pattern.permute.xlu0 0
    %240 = vperm.xlu0 %239, %v222
    %v241 = vpop.permute.xlu0 %240
    %244 = vset.pattern.permute.xlu0 0
    %245 = vperm.xlu0 %244, %v223
    %v246 = vpop.permute.xlu0 %245
    %249 = vset.pattern.permute.xlu0 0
    %250 = vperm.xlu0 %249, %v224
    %v251 = vpop.permute.xlu0 %250
    %254 = vset.pattern.permute.xlu0 0
    %255 = vperm.xlu0 %254, %v225
    %v256 = vpop.permute.xlu0 %255
    %259 = vset.pattern.permute.xlu0 0
    %260 = vperm.xlu0 %259, %v226
    %v261 = vpop.permute.xlu0 %260
    %264 = vset.pattern.permute.xlu0 0
    %265 = vperm.xlu0 %264, %v227
    %v266 = vpop.permute.xlu0 %265
    %v268 = vmul.f32 %v212, %v231
    %v269 = vmul.f32 %v213, %v236
    %v270 = vmul.f32 %v214, %v241
    %v271 = vmul.f32 %v215, %v246
    %v272 = vmul.f32 %v216, %v251
    %v273 = vmul.f32 %v217, %v256
    %v274 = vmul.f32 %v218, %v261
    %v275 = vmul.f32 %v219, %v266
    %vm276 = vcmask 64512
    %v277 = vsel %vm276, %v268, 0.0
    %v278 = vsel %vm276, %v269, 0.0
    %v279 = vadd.f32 %v277, %v278
    %v280 = vsel %vm276, %v270, 0.0
    %v281 = vadd.f32 %v279, %v280
    %v282 = vsel %vm276, %v271, 0.0
    %v283 = vadd.f32 %v281, %v282
    %v284 = vsel %vm276, %v272, 0.0
    %v285 = vadd.f32 %v283, %v284
    %v286 = vsel %vm276, %v273, 0.0
    %v287 = vadd.f32 %v285, %v286
    %v288 = vsel %vm276, %v274, 0.0
    %v289 = vadd.f32 %v287, %v288
    %v290 = vsel %vm276, %v275, 0.0
    %v291 = vadd.f32 %v289, %v290
    %v292 = vrot.slane %v291, 4
    %v293 = vadd.f32 %v291, %v292
    %v294 = vrot.slane %v293, 2
    %v295 = vadd.f32 %v293, %v294
    %v296 = vrot.slane %v295, 1
    %v297 = vadd.f32 %v295, %v296
    %s298 = sld [smem:[#allocation2]]
    %v299 = vstv %s298
    %v300 = vadd.f32 %v297, %v299
    %vm301 = vcmask 57344
    %302 = vst.msk [vmem:[#allocation3] sm:$0x1] %vm301, %v300
    // Predicated region
    $region22: #{tpu_custom_call.1} parent=1 // pred_check
      _
    $region23: #{tpu_custom_call.1} parent=1 // pred_check_branch
      %304 = sbr.rel (0) target = $region25
    $region24: #{tpu_custom_call.1} parent=1 // pred_region
      %s306 = ssub.s32 16, 16
      %307 = vsyncadd [#allocation4], %s306
      %s309 = sshll.u32 [#allocation3], 4
      %s310 = int_to_ptr.vmem [resolvable:$true] %s309
      %312 = dma.vmem_to_hbm [thread:$0]  %s310, 16, %s5, [#allocation4]
    $region25: #{tpu_custom_call.1} parent=1 // pred_fallthru
      _
    // Predicated region
    $region26: #{tpu_custom_call.1} parent=1 // pred_check
      _
    $region27: #{tpu_custom_call.1} parent=1 // pred_check_branch
      %314 = sbr.rel (0) target = $region29
    $region28: #{tpu_custom_call.1} parent=1 // pred_region
      %315 = dma.done [#allocation4], 16
    $region29: #{tpu_custom_call.1} parent=1 // pred_fallthru
      _
    %316 = vsyncpa [#allocation4], 1

</llo_original>
